<compile_context>
chip_gen: v5e
topology: v5e:2x2
jax: 0.10.0
libtpu: 0.0.40
codegen_flags: <defaults>
</compile_context>

<pallas_src>
import jax
import jax.numpy as jnp
import numpy as np
from jax.experimental import pallas as pl
from jax.experimental.pallas import tpu as pltpu


def _round_up(x, m):
    return ((x + m - 1) // m) * m


def _conv_stats_kernel(a_ref, b_ref, y_ref, s_ref, ss_ref):
    """Conv as one fused matmul per row tile + per-tile BN partial sums.

    a_ref : (tile_rows, K2p)     row-band im2col tile (lane-padded)
    b_ref : (K2p, LoutP)         block-Toeplitz weight (resident across grid)
    y_ref : (tile_rows, LoutP)   lane-dense conv output tile
    s_ref : (1, 1, LoutP)        per-tile partial sum   over rows
    ss_ref: (1, 1, LoutP)        per-tile partial sumsq over rows
    """
    y = jnp.dot(a_ref[...], b_ref[...], preferred_element_type=jnp.float32)
    y_ref[...] = y.astype(y_ref.dtype)
    # Cross-sublane reductions go to the XLU; the y*y VPU work hides under MXU.
    s_ref[0] = jnp.sum(y, axis=0, keepdims=True)
    ss_ref[0] = jnp.sum(y * y, axis=0, keepdims=True)


def _bn_relu_kernel(y_ref, scale_ref, shift_ref, o_ref):
    """Lane-dense BN (scale/shift folded per lane) + ReLU epilogue."""
    o_ref[...] = jnp.maximum(
        y_ref[...] * scale_ref[...] + shift_ref[...], 0.0
    ).astype(o_ref.dtype)


def _pick_tile_rows(M, K2p, LoutP, budget_bytes=20 << 20, cap=512):
    """Largest multiple-of-8 row tile that fits the VMEM budget (double-buffered)."""
    m8 = _round_up(M, 8)
    fixed = 2 * K2p * LoutP * 4                # weight buffers
    per_row = 2 * (K2p + 3 * LoutP) * 4        # A tile + y/out tiles, x2 buffers
    avail = max(budget_bytes - fixed, per_row * 8)
    rows = max(8, min(cap, avail // per_row, m8))
    return int((rows // 8) * 8)


def conv_bn_relu_pallas(x_nchw, w_oihw, gamma, beta, eps=1e-5):
    """Fused Conv(3x3, s=1, p=1, no bias) + BatchNorm(batch stats) + ReLU."""
    N, Cin, H, W = x_nchw.shape
    Cout, Cin2, KH, KW = w_oihw.shape
    assert Cin2 == Cin and KH == 3 and KW == 3

    Wp = W + 2                      # padded width
    Lout = W * Cout                 # output lane width
    K2 = KH * Wp * Cin              # contraction depth of the row-band matmul
    M = N * H                       # number of output image rows

    # Lane-pad contraction and output widths to multiples of 128 (dense vregs,
    # unmasked stores).  Zero padding is exact for the matmul and BN sums.
    K2p = _round_up(K2, 128)
    LoutP = _round_up(Lout, 128)

    # ----- wrapper layout plumbing (plain JAX) -------------------------------
    # NCHW -> NHWC, zero-pad spatial dims by 1.
    x_nhwc = jnp.transpose(x_nchw, (0, 2, 3, 1)).astype(jnp.float32)
    x_pad = jnp.pad(x_nhwc, ((0, 0), (1, 1), (1, 1), (0, 0)))

    # Row-band im2col: A[(n*H+h), (dy, xw, ci)] = x_pad[n, h+dy, xw, ci].
    bands = jnp.stack([x_pad[:, h:h + KH] for h in range(H)], axis=1)  # (N,H,KH,Wp,Cin)
    A = bands.reshape(M, K2)

    # Block-Toeplitz weight: B[(dy,xw,ci),(w,co)] = wt[dy, xw-w, ci, co]
    # for 0 <= xw-w < KW, else 0.  Built once from the 3x3 kernel.
    wt = jnp.transpose(w_oihw, (2, 3, 1, 0)).astype(jnp.float32)       # (KH,KW,Cin,Cout)
    dx = jnp.arange(KW)[:, None, None]
    xw = jnp.arange(Wp)[None, :, None]
    wv = jnp.arange(W)[None, None, :]
    S = (xw == wv + dx).astype(jnp.float32)                            # (KW, Wp, W)
    B = jnp.einsum('apw,daco->dpcwo', S, wt).reshape(K2, Lout)

    # Zero-pad to lane-aligned shapes.
    if K2p != K2:
        A = jnp.pad(A, ((0, 0), (0, K2p - K2)))
        B = jnp.pad(B, ((0, K2p - K2), (0, 0)))
    if LoutP != Lout:
        B = jnp.pad(B, ((0, 0), (0, LoutP - Lout)))

    # Auto-size row tiles from the VMEM budget, then pad the row count.  Zero
    # rows contribute nothing to the BN sums, so statistics stay exact.
    tile_rows = _pick_tile_rows(M, K2p, LoutP)
    Mp = _round_up(M, tile_rows)
    if Mp != M:
        A = jnp.pad(A, ((0, Mp - M), (0, 0)))
    T = Mp // tile_rows

    cparams = pltpu.CompilerParams(
        dimension_semantics=("parallel",),
        vmem_limit_bytes=64 * 1024 * 1024,
    )

    # ----- phase 1: conv (single fused contraction) + partial BN sums --------
    conv_y, psum, psumsq = pl.pallas_call(
        _conv_stats_kernel,
        grid=(T,),
        out_shape=(
            jax.ShapeDtypeStruct((Mp, LoutP), jnp.float32),
            jax.ShapeDtypeStruct((T, 1, LoutP), jnp.float32),
            jax.ShapeDtypeStruct((T, 1, LoutP), jnp.float32),
        ),
        in_specs=[
            pl.BlockSpec((tile_rows, K2p), lambda i: (i, 0)),
            pl.BlockSpec((K2p, LoutP), lambda i: (0, 0)),   # weight stays resident
        ],
        out_specs=(
            pl.BlockSpec((tile_rows, LoutP), lambda i: (i, 0)),
            pl.BlockSpec((1, 1, LoutP), lambda i: (i, 0, 0)),
            pl.BlockSpec((1, 1, LoutP), lambda i: (i, 0, 0)),
        ),
        compiler_params=cparams,
        cost_estimate=pl.CostEstimate(
            flops=2 * Mp * K2p * LoutP,
            transcendentals=0,
            bytes_accessed=4 * (Mp * K2p + K2p * LoutP + Mp * LoutP),
        ),
    )(A, B)

    # ----- BN statistics finalization (tiny, plain JAX) ----------------------
    count = N * H * W
    lane_sum = jnp.sum(psum, axis=(0, 1))[:Lout]            # (Lout,)
    lane_sumsq = jnp.sum(psumsq, axis=(0, 1))[:Lout]        # (Lout,)
    ch_sum = lane_sum.reshape(W, Cout).sum(axis=0)          # (Cout,)
    ch_sumsq = lane_sumsq.reshape(W, Cout).sum(axis=0)      # (Cout,)
    mean = ch_sum / count
    var = jnp.maximum(ch_sumsq / count - mean * mean, 0.0)  # biased (training-mode)
    inv_std = jax.lax.rsqrt(var + eps)
    scale_c = gamma.astype(jnp.float32) * inv_std
    shift_c = beta.astype(jnp.float32) - mean * scale_c
    # Per-lane (w*Cout + c) scale/shift vectors for the lane-dense epilogue.
    scale_v = jnp.tile(scale_c, W).reshape(1, Lout)
    shift_v = jnp.tile(shift_c, W).reshape(1, Lout)
    if LoutP != Lout:
        scale_v = jnp.pad(scale_v, ((0, 0), (0, LoutP - Lout)))
        shift_v = jnp.pad(shift_v, ((0, 0), (0, LoutP - Lout)))

    # ----- phase 2: lane-dense normalize + ReLU ------------------------------
    out2d = pl.pallas_call(
        _bn_relu_kernel,
        grid=(T,),
        out_shape=jax.ShapeDtypeStruct((Mp, LoutP), jnp.float32),
        in_specs=[
            pl.BlockSpec((tile_rows, LoutP), lambda i: (i, 0)),
            pl.BlockSpec((1, LoutP), lambda i: (0, 0)),
            pl.BlockSpec((1, LoutP), lambda i: (0, 0)),
        ],
        out_specs=pl.BlockSpec((tile_rows, LoutP), lambda i: (i, 0)),
        compiler_params=cparams,
        cost_estimate=pl.CostEstimate(
            flops=2 * Mp * LoutP,
            transcendentals=0,
            bytes_accessed=4 * (2 * Mp * LoutP + 2 * LoutP),
        ),
    )(conv_y, scale_v, shift_v)

    # (N*H, W*Cout) -> NHWC -> NCHW (wrapper layout plumbing).
    out = out2d[:M, :Lout].reshape(N, H, W, Cout)
    return jnp.transpose(out, (0, 3, 1, 2))


def ref_conv_bn_relu(x_nchw, w_oihw, gamma, beta, eps=1e-5):
    """Pure-JAX reference (matches PyTorch training-mode forward)."""
    y = jax.lax.conv_general_dilated(
        x_nchw, w_oihw, window_strides=(1, 1), padding=((1, 1), (1, 1)),
        dimension_numbers=("NCHW", "OIHW", "NCHW"))
    mean = jnp.mean(y, axis=(0, 2, 3), keepdims=True)
    var = jnp.mean((y - mean) ** 2, axis=(0, 2, 3), keepdims=True)
    yn = (y - mean) * jax.lax.rsqrt(var + eps)
    yn = yn * gamma.reshape(1, -1, 1, 1) + beta.reshape(1, -1, 1, 1)
    return jnp.maximum(yn, 0.0)


if __name__ == "__main__":
    # TODO(synk): BatchNorm's running_mean/running_var buffer updates are a
    # training side effect that does not affect this forward's output; not modeled.
    key = jax.random.PRNGKey(0)
    k_x, k_w, k_g, k_b = jax.random.split(key, 4)

    N, Cin, H, W = 2, 4, 16, 16
    Cout = 8

    x = jax.random.normal(k_x, (N, Cin, H, W), dtype=jnp.float32)
    w = 0.1 * jax.random.normal(k_w, (Cout, Cin, 3, 3), dtype=jnp.float32)
    gamma = 1.0 + 0.1 * jax.random.normal(k_g, (Cout,), dtype=jnp.float32)
    beta = 0.1 * jax.random.normal(k_b, (Cout,), dtype=jnp.float32)

    out = jax.block_until_ready(conv_bn_relu_pallas(x, w, gamma, beta))
    ref = jax.block_until_ready(ref_conv_bn_relu(x, w, gamma, beta))
    np.testing.assert_allclose(np.asarray(out), np.asarray(ref),
                               rtol=2e-3, atol=2e-3)
    print("KERNEL_OK")
</pallas_src>

<mosaic_0001>
module attributes {stable_mosaic.version = 11 : i64} {
  func.func @_conv_stats_kernel(%arg0: i32, %arg1: memref<32x256xf32, #tpu.memory_space<vmem>>, %arg2: memref<256x128xf32, #tpu.memory_space<vmem>>, %arg3: memref<32x128xf32, #tpu.memory_space<vmem>>, %arg4: memref<1x1x128xf32, #tpu.memory_space<vmem>>, %arg5: memref<1x1x128xf32, #tpu.memory_space<vmem>>) attributes {dimension_semantics = [#tpu.dimension_semantics<parallel>], iteration_bounds = array<i64: 1>, scalar_prefetch = 0 : i64, scratch_operands = 0 : i64, tpu.core_type = #tpu.core_type<tc>, window_params = [{transform_indices = @transform_0, window_bounds = array<i64: 32, 256>}, {pipeline_mode = #tpu.pipeline_mode<synchronous>, transform_indices = @transform_1, window_bounds = array<i64: 256, 128>}, {transform_indices = @transform_2, window_bounds = array<i64: 32, 128>}, {transform_indices = @transform_3, window_bounds = array<i64: 1, 1, 128>}, {transform_indices = @transform_4, window_bounds = array<i64: 1, 1, 128>}]} {
    %c0 = arith.constant 0 : index
    %c0_0 = arith.constant 0 : index
    %0 = vector.load %arg1[%c0, %c0_0] : memref<32x256xf32, #tpu.memory_space<vmem>>, vector<32x256xf32>
    %c0_1 = arith.constant 0 : index
    %c0_2 = arith.constant 0 : index
    %1 = vector.load %arg2[%c0_1, %c0_2] : memref<256x128xf32, #tpu.memory_space<vmem>>, vector<256x128xf32>
    %cst = arith.constant dense<0.000000e+00> : vector<32x128xf32>
    %2 = tpu.matmul %0, %1, %cst {dimension_numbers = #tpu.dot_dimension_numbers<[1], [0], [0], [1], [0, 0, 1, 1], [], []>} : vector<32x256xf32>, vector<256x128xf32>, vector<32x128xf32> -> vector<32x128xf32>
    %c0_3 = arith.constant 0 : index
    %c0_4 = arith.constant 0 : index
    %3 = vector.load %arg3[%c0_3, %c0_4] : memref<32x128xf32, #tpu.memory_space<vmem>>, vector<32x128xf32>
    tpu.vector_store %arg3[%c0_3, %c0_4], %2 {strides = array<i32>} : memref<32x128xf32, #tpu.memory_space<vmem>>, vector<32x128xf32>,
    %cst_5 = arith.constant dense<0.000000e+00> : vector<128xf32>
    %4 = vector.multi_reduction <add>, %2, %cst_5 [0] : vector<32x128xf32> to vector<128xf32>
    %5 = vector.shape_cast %4 : vector<128xf32> to vector<1x128xf32>
    %c0_6 = arith.constant 0 : index
    %c0_7 = arith.constant 0 : index
    %c0_8 = arith.constant 0 : index
    %6 = vector.load %arg4[%c0_6, %c0_7, %c0_8] : memref<1x1x128xf32, #tpu.memory_space<vmem>>, vector<1x1x128xf32>
    %7 = vector.shape_cast %6 : vector<1x1x128xf32> to vector<1x128xf32>
    %8 = vector.shape_cast %5 : vector<1x128xf32> to vector<1x1x128xf32>
    tpu.vector_store %arg4[%c0_6, %c0_7, %c0_8], %8 {strides = array<i32>} : memref<1x1x128xf32, #tpu.memory_space<vmem>>, vector<1x1x128xf32>,
    %9 = arith.mulf %2, %2 : vector<32x128xf32>
    %cst_9 = arith.constant dense<0.000000e+00> : vector<128xf32>
    %10 = vector.multi_reduction <add>, %9, %cst_9 [0] : vector<32x128xf32> to vector<128xf32>
    %11 = vector.shape_cast %10 : vector<128xf32> to vector<1x128xf32>
    %c0_10 = arith.constant 0 : index
    %c0_11 = arith.constant 0 : index
    %c0_12 = arith.constant 0 : index
    %12 = vector.load %arg5[%c0_10, %c0_11, %c0_12] : memref<1x1x128xf32, #tpu.memory_space<vmem>>, vector<1x1x128xf32>
    %13 = vector.shape_cast %12 : vector<1x1x128xf32> to vector<1x128xf32>
    %14 = vector.shape_cast %11 : vector<1x128xf32> to vector<1x1x128xf32>
    tpu.vector_store %arg5[%c0_10, %c0_11, %c0_12], %14 {strides = array<i32>} : memref<1x1x128xf32, #tpu.memory_space<vmem>>, vector<1x1x128xf32>,
    return
  }
  func.func @transform_0(%arg0: i32) -> (i32, i32) {
    %c0_i32 = arith.constant 0 : i32
    %c0_i32_0 = arith.constant 0 : i32
    return %arg0, %c0_i32 : i32, i32
  }
  func.func @transform_1(%arg0: i32) -> (i32, i32) {
    %c0_i32 = arith.constant 0 : i32
    %c0_i32_0 = arith.constant 0 : i32
    %c0_i32_1 = arith.constant 0 : i32
    return %c0_i32, %c0_i32_0 : i32, i32
  }
  func.func @transform_2(%arg0: i32) -> (i32, i32) {
    %c0_i32 = arith.constant 0 : i32
    %c0_i32_0 = arith.constant 0 : i32
    return %arg0, %c0_i32 : i32, i32
  }
  func.func @transform_3(%arg0: i32) -> (i32, i32, i32) {
    %c0_i32 = arith.constant 0 : i32
    %c0_i32_0 = arith.constant 0 : i32
    %c0_i32_1 = arith.constant 0 : i32
    return %arg0, %c0_i32, %c0_i32_0 : i32, i32, i32
  }
  func.func @transform_4(%arg0: i32) -> (i32, i32, i32) {
    %c0_i32 = arith.constant 0 : i32
    %c0_i32_0 = arith.constant 0 : i32
    %c0_i32_1 = arith.constant 0 : i32
    return %arg0, %c0_i32, %c0_i32_0 : i32, i32, i32
  }
}

</mosaic_0001>

<llo_original>
// kernel: tpu_custom_call.1
$region0: #{tpu_custom_call.1}
  #allocation0 [shape = 'u32[]', space=smem, size = 0x4, offset = 0x4, fixed_abs, tag = 'smem constant byte address 0x4 - core index']
  #allocation1 [shape = 'u32[72,128]{1,0:T(1,128)}', space=vmem, size = 0x9000, scoped, tag = 'internal scratch']
  %s0 = inlined_call_operand.hbm [shape: f32[32,256], index: 0, kind: input, shape index: {}]
  %s1 = inlined_call_operand.hbm [shape: f32[256,128], index: 1, kind: input, shape index: {}]
  %s2 = inlined_call_operand.hbm [shape: f32[32,128], index: 2, kind: output, shape index: {0}]
  %s3 = inlined_call_operand.hbm [shape: f32[1,1,128], index: 3, kind: output, shape index: {1}]
  %s4 = inlined_call_operand.hbm [shape: f32[1,1,128], index: 4, kind: output, shape index: {2}]
  %5 = xla_tuple %s2, %s3, %s4
  %s6 = sld [smem:[#allocation0]]
  $region42: #{tpu_custom_call.1} parent=0
    _
  %s8 = ssub.s32 1, %s6
  %s9 = scalar_select 0, %s8, %s6
  $region1: #{tpu_custom_call.1} parent=0
    #allocation2 [shape = 'u8[32768]{0}', space=vmem, size = 0x8000, scoped, tag = 'input window, operand 0, single buffered']
    #allocation3 [shape = 's32[1]{0}', space=sflag, size = 0x4, scoped, tag = 'scoped memory for tpu_custom_call.1']
    #allocation4 [shape = 's32[1]{0}', space=sflag, size = 0x4, scoped, tag = 'scoped memory for tpu_custom_call.1']
    #allocation5 [shape = 'u8[131072]{0}', space=vmem, size = 0x20000, scoped, tag = 'input window, operand 1, single buffered']
    #allocation6 [shape = 's32[1]{0}', space=sflag, size = 0x4, scoped, tag = 'scoped memory for tpu_custom_call.1']
    #allocation7 [shape = 'u8[16384]{0}', space=vmem, size = 0x4000, scoped, tag = 'output window, operand 0, single buffered']
    #allocation8 [shape = 'u8[512]{0}', space=vmem, size = 0x400, scoped, tag = 'output window, operand 1, single buffered']
    #allocation9 [shape = 's32[1]{0}', space=sflag, size = 0x4, scoped, tag = 'scoped memory for tpu_custom_call.1']
    #allocation10 [shape = 'u8[512]{0}', space=vmem, size = 0x400, scoped, tag = 'output window, operand 2, single buffered']
    %10 = vsyncpa [#allocation3], 0
    %11 = vsyncpa [#allocation6], 0
    %12 = vsyncpa [#allocation4], 0
    %13 = vsyncpa [#allocation9], 0
    // Predicated region
    $region2: #{tpu_custom_call.1} parent=1 // pred_check
      _
    $region3: #{tpu_custom_call.1} parent=1 // pred_check_branch
      %15 = sbr.rel (0) target = $region5
    $region4: #{tpu_custom_call.1} parent=1 // pred_region
      %17 = vsyncadd [#allocation3], 0
      %s18 = sshll.u32 %s0, 4
      %s19 = int_to_ptr.hbm [resolvable:$true] %s18
      %s20 = sshll.u32 [#allocation2], 4
      %s21 = int_to_ptr.vmem [resolvable:$true] %s20
      %26 = dma.hbm_to_vmem [thread:$0]  %s19, 1024, %s21, [#allocation3], 256, 256, 16
    $region5: #{tpu_custom_call.1} parent=1 // pred_fallthru
      _
    // Predicated region
    $region6: #{tpu_custom_call.1} parent=1 // pred_check
      _
    $region7: #{tpu_custom_call.1} parent=1 // pred_check_branch
      %28 = sbr.rel (0) target = $region9
    $region8: #{tpu_custom_call.1} parent=1 // pred_region
      %30 = vsyncadd [#allocation6], 0
      %s31 = sshll.u32 %s1, 4
      %s32 = int_to_ptr.hbm [resolvable:$true] %s31
      %s33 = sshll.u32 [#allocation5], 4
      %s34 = int_to_ptr.vmem [resolvable:$true] %s33
      %39 = dma.hbm_to_vmem [thread:$0]  %s32, 4096, %s34, [#allocation6], 128, 128, 8
    $region9: #{tpu_custom_call.1} parent=1 // pred_fallthru
      _
    // Predicated region
    $region10: #{tpu_custom_call.1} parent=1 // pred_check
      _
    $region11: #{tpu_custom_call.1} parent=1 // pred_check_branch
      %41 = sbr.rel (0) target = $region13
    $region12: #{tpu_custom_call.1} parent=1 // pred_region
      %43 = dma.done [#allocation3], 1024
    $region13: #{tpu_custom_call.1} parent=1 // pred_fallthru
      _
    // Predicated region
    $region14: #{tpu_custom_call.1} parent=1 // pred_check
      _
    $region15: #{tpu_custom_call.1} parent=1 // pred_check_branch
      %45 = sbr.rel (0) target = $region17
    $region16: #{tpu_custom_call.1} parent=1 // pred_region
      %47 = dma.done [#allocation6], 4096
    $region17: #{tpu_custom_call.1} parent=1 // pred_fallthru
      _
    %v48 = vld [vmem:[#allocation2] sm:$0xff]
    %v49 = vld [vmem:[#allocation2 + $0x8] sm:$0xff]
    %v50 = vld [vmem:[#allocation2 + $0x10] sm:$0xff]
    %v51 = vld [vmem:[#allocation2 + $0x18] sm:$0xff]
    %v52 = vld [vmem:[#allocation2 + $0x20] sm:$0xff]
    %v53 = vld [vmem:[#allocation2 + $0x28] sm:$0xff]
    %v54 = vld [vmem:[#allocation2 + $0x30] sm:$0xff]
    %v55 = vld [vmem:[#allocation2 + $0x38] sm:$0xff]
    %v56 = vld [vmem:[#allocation5] sm:$0xff]
    %v57 = vld [vmem:[#allocation5 + $0x8] sm:$0xff]
    %v58 = vld [vmem:[#allocation5 + $0x10] sm:$0xff]
    %v59 = vld [vmem:[#allocation5 + $0x18] sm:$0xff]
    %v60 = vld [vmem:[#allocation5 + $0x20] sm:$0xff]
    %v61 = vld [vmem:[#allocation5 + $0x28] sm:$0xff]
    %v62 = vld [vmem:[#allocation5 + $0x30] sm:$0xff]
    %v63 = vld [vmem:[#allocation5 + $0x38] sm:$0xff]
    %v64 = vld [vmem:[#allocation5 + $0x40] sm:$0xff]
    %v65 = vld [vmem:[#allocation5 + $0x48] sm:$0xff]
    %v66 = vld [vmem:[#allocation5 + $0x50] sm:$0xff]
    %v67 = vld [vmem:[#allocation5 + $0x58] sm:$0xff]
    %v68 = vld [vmem:[#allocation5 + $0x60] sm:$0xff]
    %v69 = vld [vmem:[#allocation5 + $0x68] sm:$0xff]
    %v70 = vld [vmem:[#allocation5 + $0x70] sm:$0xff]
    %v71 = vld [vmem:[#allocation5 + $0x78] sm:$0xff]
    %v72 = vld [vmem:[#allocation5 + $0x80] sm:$0xff]
    %v73 = vld [vmem:[#allocation5 + $0x88] sm:$0xff]
    %v74 = vld [vmem:[#allocation5 + $0x90] sm:$0xff]
    %v75 = vld [vmem:[#allocation5 + $0x98] sm:$0xff]
    %v76 = vld [vmem:[#allocation5 + $0xa0] sm:$0xff]
    %v77 = vld [vmem:[#allocation5 + $0xa8] sm:$0xff]
    %v78 = vld [vmem:[#allocation5 + $0xb0] sm:$0xff]
    %v79 = vld [vmem:[#allocation5 + $0xb8] sm:$0xff]
    %v80 = vld [vmem:[#allocation5 + $0xc0] sm:$0xff]
    %v81 = vld [vmem:[#allocation5 + $0xc8] sm:$0xff]
    %v82 = vld [vmem:[#allocation5 + $0xd0] sm:$0xff]
    %v83 = vld [vmem:[#allocation5 + $0xd8] sm:$0xff]
    %v84 = vld [vmem:[#allocation5 + $0xe0] sm:$0xff]
    %v85 = vld [vmem:[#allocation5 + $0xe8] sm:$0xff]
    %v86 = vld [vmem:[#allocation5 + $0xf0] sm:$0xff]
    %v87 = vld [vmem:[#allocation5 + $0xf8] sm:$0xff]
    %88 = vmatpush.msra.mxu0 %v71
    %89 = vmatpush.msra.mxu0 %v70
    %90 = vmatpush.msra.mxu0 %v69
    %91 = vmatpush.msra.mxu0 %v68
    %92 = vmatpush.msra.mxu0 %v67
    %93 = vmatpush.msra.mxu0 %v66
    %94 = vmatpush.msra.mxu0 %v65
    %95 = vmatpush.msra.mxu0 %v64
    %96 = vmatpush.msra.mxu0 %v63
    %97 = vmatpush.msra.mxu0 %v62
    %98 = vmatpush.msra.mxu0 %v61
    %99 = vmatpush.msra.mxu0 %v60
    %100 = vmatpush.msra.mxu0 %v59
    %101 = vmatpush.msra.mxu0 %v58
    %102 = vmatpush.msra.mxu0 %v57
    %103 = vmatpush.msra.mxu0 %v56
    %104 = vmatmul.f32.gmra.mxu0 %v48
    %v105 = vpop.f32.mrf.mxu0
    %v106 = vadd.f32 0.0, %v105
    %107 = vmatmul.f32.gmra.mxu0 %v50
    %v108 = vpop.f32.mrf.mxu0
    %v109 = vadd.f32 0.0, %v108
    %110 = vmatmul.f32.gmra.mxu0 %v52
    %v111 = vpop.f32.mrf.mxu0
    %v112 = vadd.f32 0.0, %v111
    %113 = vmatmul.f32.gmra.mxu0 %v54
    %v114 = vpop.f32.mrf.mxu0
    %v115 = vadd.f32 0.0, %v114
    %116 = vdwg.mxu0
    %117 = vmatpush.msra.mxu0 %v87
    %118 = vmatpush.msra.mxu0 %v86
    %119 = vmatpush.msra.mxu0 %v85
    %120 = vmatpush.msra.mxu0 %v84
    %121 = vmatpush.msra.mxu0 %v83
    %122 = vmatpush.msra.mxu0 %v82
    %123 = vmatpush.msra.mxu0 %v81
    %124 = vmatpush.msra.mxu0 %v80
    %125 = vmatpush.msra.mxu0 %v79
    %126 = vmatpush.msra.mxu0 %v78
    %127 = vmatpush.msra.mxu0 %v77
    %128 = vmatpush.msra.mxu0 %v76
    %129 = vmatpush.msra.mxu0 %v75
    %130 = vmatpush.msra.mxu0 %v74
    %131 = vmatpush.msra.mxu0 %v73
    %132 = vmatpush.msra.mxu0 %v72
    %133 = vmatmul.f32.gmra.mxu0 %v49
    %v134 = vpop.f32.mrf.mxu0
    %v135 = vadd.f32 %v106, %v134
    %136 = vmatmul.f32.gmra.mxu0 %v51
    %v137 = vpop.f32.mrf.mxu0
    %v138 = vadd.f32 %v109, %v137
    %139 = vmatmul.f32.gmra.mxu0 %v53
    %v140 = vpop.f32.mrf.mxu0
    %v141 = vadd.f32 %v112, %v140
    %142 = vmatmul.f32.gmra.mxu0 %v55
    %v143 = vpop.f32.mrf.mxu0
    %v144 = vadd.f32 %v115, %v143
    %145 = vdwg.mxu0
    %146 = vst [vmem:[#allocation7] sm:$0xff] %v135
    %147 = vst [vmem:[#allocation7 + $0x8] sm:$0xff] %v138
    %148 = vst [vmem:[#allocation7 + $0x10] sm:$0xff] %v141
    %149 = vst [vmem:[#allocation7 + $0x18] sm:$0xff] %v144
    %v150 = vadd.f32 %v135, %v138
    %v151 = vadd.f32 %v150, %v141
    %v152 = vadd.f32 %v151, %v144
    %v153 = vrot.slane %v152, 4
    %v154 = vadd.f32 %v152, %v153
    %v155 = vrot.slane %v154, 2
    %v156 = vadd.f32 %v154, %v155
    %v157 = vrot.slane %v156, 1
    %v158 = vadd.f32 %v156, %v157
    %159 = vst [vmem:[#allocation8] sm:$0x1] %v158
    %v160 = vmul.f32 %v135, %v135
    %v161 = vmul.f32 %v138, %v138
    %v162 = vmul.f32 %v141, %v141
    %v163 = vmul.f32 %v144, %v144
    %v164 = vadd.f32 %v160, %v161
    %v165 = vadd.f32 %v164, %v162
    %v166 = vadd.f32 %v165, %v163
    %v167 = vrot.slane %v166, 4
    %v168 = vadd.f32 %v166, %v167
    %v169 = vrot.slane %v168, 2
    %v170 = vadd.f32 %v168, %v169
    %v171 = vrot.slane %v170, 1
    %v172 = vadd.f32 %v170, %v171
    %173 = vst [vmem:[#allocation10] sm:$0x1] %v172
    // Predicated region
    $region18: #{tpu_custom_call.1} parent=1 // pred_check
      _
    $region19: #{tpu_custom_call.1} parent=1 // pred_check_branch
      %175 = sbr.rel (0) target = $region21
    $region20: #{tpu_custom_call.1} parent=1 // pred_region
      %177 = vsyncadd [#allocation4], 0
      %s178 = sshll.u32 [#allocation7], 4
      %s179 = int_to_ptr.vmem [resolvable:$true] %s178
      %s180 = sshll.u32 %s2, 4
      %s181 = int_to_ptr.hbm [resolvable:$true] %s180
      %186 = dma.vmem_to_hbm [thread:$0]  %s179, 512, %s181, [#allocation4], 128, 128, 8
    $region21: #{tpu_custom_call.1} parent=1 // pred_fallthru
      _
    // Predicated region
    $region22: #{tpu_custom_call.1} parent=1 // pred_check
      _
    $region23: #{tpu_custom_call.1} parent=1 // pred_check_branch
      %188 = sbr.rel (0) target = $region25
    $region24: #{tpu_custom_call.1} parent=1 // pred_region
      %190 = vsyncadd [#allocation9], 0
      %s192 = sshll.u32 [#allocation8], 4
      %s193 = int_to_ptr.vmem [resolvable:$true] %s192
      %s194 = sshll.u32 %s3, 4
      %s195 = int_to_ptr.hbm [resolvable:$true] %s194
      %197 = dma.vmem_to_hbm [thread:$0]  %s193, 16, %s195, [#allocation9]
    $region25: #{tpu_custom_call.1} parent=1 // pred_fallthru
      _
    // Predicated region
    $region26: #{tpu_custom_call.1} parent=1 // pred_check
      _
    $region27: #{tpu_custom_call.1} parent=1 // pred_check_branch
      %199 = sbr.rel (0) target = $region29
    $region28: #{tpu_custom_call.1} parent=1 // pred_region
      %201 = vsyncadd [#allocation9], 0
      %s203 = sshll.u32 [#allocation10], 4
      %s204 = int_to_ptr.vmem [resolvable:$true] %s203
      %s205 = sshll.u32 %s4, 4
      %s206 = int_to_ptr.hbm [resolvable:$true] %s205
      %208 = dma.vmem_to_hbm [thread:$0]  %s204, 16, %s206, [#allocation9]
    $region29: #{tpu_custom_call.1} parent=1 // pred_fallthru
      _
    // Predicated region
    $region30: #{tpu_custom_call.1} parent=1 // pred_check
      _
    $region31: #{tpu_custom_call.1} parent=1 // pred_check_branch
      %210 = sbr.rel (0) target = $region33
    $region32: #{tpu_custom_call.1} parent=1 // pred_region
      %212 = dma.done [#allocation4], 512
    $region33: #{tpu_custom_call.1} parent=1 // pred_fallthru
      _
    // Predicated region
    $region34: #{tpu_custom_call.1} parent=1 // pred_check
      _
    $region35: #{tpu_custom_call.1} parent=1 // pred_check_branch
      %214 = sbr.rel (0) target = $region37
    $region36: #{tpu_custom_call.1} parent=1 // pred_region
      %216 = dma.done [#allocation9], 16
    $region37: #{tpu_custom_call.1} parent=1 // pred_fallthru
      _
    // Predicated region
    $region38: #{tpu_custom_call.1} parent=1 // pred_check
      _
    $region39: #{tpu_custom_call.1} parent=1 // pred_check_branch
      %218 = sbr.rel (0) target = $region41
    $region40: #{tpu_custom_call.1} parent=1 // pred_region
      %220 = dma.done [#allocation9], 16
    $region41: #{tpu_custom_call.1} parent=1 // pred_fallthru
      _
    %221 = vsyncpa [#allocation3], 1
    %222 = vsyncpa [#allocation6], 1
    %223 = vsyncpa [#allocation4], 1
    %224 = vsyncpa [#allocation9], 1

</llo_original>
